<compile_context>
chip_gen: v7x
topology: tpu7x:2x2x1
jax: 0.10.0
libtpu: 0.0.40
codegen_flags: <defaults>
</compile_context>

<pallas_src>
import functools

import jax
import jax.numpy as jnp
from jax.experimental import pallas as pl
from jax.experimental.pallas import tpu as pltpu

EPS = 1e-5  # nn.InstanceNorm2d default


# -----------------------------------------------------------------------------
# Pallas kernel
#   grid = (N, n_co, n_pt);  ("parallel", "parallel", "arbitrary")
#   patches_ref : (1, K, TP)        one P-tile of one instance's im2col patches
#   w_ref       : (TCO, K)          conv-weight tile, K ordered as (kh, kw, C_in)
#   out_ref     : (1, TCO, P_pad)   resident across the P-tile axis
#   sum/ssq_ref : (TCO, 1) f32      fused InstanceNorm statistics
# -----------------------------------------------------------------------------
def _trans_down_kernel(p_true, patches_ref, w_ref, out_ref, sum_ref, ssq_ref):
    pt = pl.program_id(2)
    n_pt = pl.num_programs(2)
    tp = patches_ref.shape[2]

    @pl.when(pt == 0)
    def _():
        sum_ref[...] = jnp.zeros_like(sum_ref)
        ssq_ref[...] = jnp.zeros_like(ssq_ref)

    # Conv as (TCO, K) @ (K, TP) on the MXU, f32 accumulate.  P is the lane dim ->
    # lane-dense stores and an NCHW-ordered result.
    y = jnp.dot(w_ref[...], patches_ref[0], preferred_element_type=jnp.float32)

    # Fused InstanceNorm statistics, accumulated in f32 from the un-rounded conv tile.
    # Padded P columns hold zero patches -> zero conv output -> they add 0 to both
    # sums; only the divisor (true P) matters in the finalize.
    sum_ref[...] += jnp.sum(y, axis=1, keepdims=True)
    ssq_ref[...] += jnp.sum(y * y, axis=1, keepdims=True)

    start = pl.multiple_of(pt * tp, tp)
    out_ref[0, :, pl.ds(start, tp)] = y.astype(out_ref.dtype)

    # Finalize on the last P tile: single read-modify-write of the resident block.
    @pl.when(pt == n_pt - 1)
    def _():
        inv_p = jnp.float32(1.0 / p_true)
        mu = sum_ref[...] * inv_p                                # (TCO, 1)
        var = ssq_ref[...] * inv_p - mu * mu                     # biased, like PyTorch IN
        scale = jax.lax.rsqrt(var + EPS)
        yf = out_ref[0].astype(jnp.float32)                      # (TCO, P_pad)
        out_ref[0] = jnp.maximum((yf - mu) * scale, 0.0).astype(out_ref.dtype)


# -----------------------------------------------------------------------------
# JAX glue: im2col (3x3, stride 2, pad 1) directly in the transposed (N, K, P) layout
# -----------------------------------------------------------------------------
def _im2col_kp(x_nchw, kh=3, kw=3, stride=2, pad=1):
    N, C, H, W = x_nchw.shape
    x_p = jnp.pad(x_nchw, ((0, 0), (0, 0), (pad, pad), (pad, pad)))
    Hp, Wp = H + 2 * pad, W + 2 * pad
    Ho = (Hp - kh) // stride + 1
    Wo = (Wp - kw) // stride + 1
    taps = []
    for i in range(kh):
        for j in range(kw):
            taps.append(x_p[:, :, i:i + stride * Ho:stride, j:j + stride * Wo:stride])
    # (N, kh*kw, C, Ho, Wo) -> (N, K, P), K order = (kh, kw, C_in)
    patches = jnp.stack(taps, axis=1).reshape(N, kh * kw * C, Ho * Wo)
    return patches, Ho, Wo


def _round_up(x, m):
    return (x + m - 1) // m * m


def _choose_p_tile(P, K, patch_itemsize, tile_budget_bytes):
    """Largest multiple of 128 such that one (K, TP) patches buffer fits the budget."""
    tp_cap = max(128, (tile_budget_bytes // max(1, K * patch_itemsize)) // 128 * 128)
    return int(min(tp_cap, _round_up(P, 128)))


def _choose_co_tile(C_out, P_pad, out_itemsize, out_budget_bytes):
    """Largest C_out tile whose double-buffered (TCO, P_pad) block fits the budget.
    Must divide C_out and be either the full C_out or a sublane-aligned multiple."""
    cap = max(1, out_budget_bytes // (2 * P_pad * out_itemsize))
    if C_out <= cap:
        return C_out
    sub = 8 if out_itemsize >= 4 else 16
    best = 0
    for d in range(sub, min(C_out, cap) + 1, sub):
        if C_out % d == 0:
            best = d
    return best if best else C_out  # fallback: full C_out (bigger VMEM, still valid)


def _vmem_budgets():
    """(patch-buffer budget, resident-output budget, vmem_limit ceiling) per chip."""
    try:
        vmem_cap = int(pltpu.get_tpu_info().vmem_capacity_bytes)
    except Exception:
        vmem_cap = 64 << 20  # conservative (v7x)
    if vmem_cap >= (128 << 20):      # v5e / v6e: big tiles amortize per-step overhead
        return 12 << 20, 48 << 20, 96 << 20
    return 6 << 20, 20 << 20, 48 << 20  # v7x: stay well under 64 MiB physical


# -----------------------------------------------------------------------------
# Wrapper: NCHW in -> NCHW out (matches PyTorch Trans_Down.forward)
# -----------------------------------------------------------------------------
def trans_down(x_nchw, weight_oihw, bias=None, *, compute_dtype=jnp.bfloat16):
    # `bias` accepted for parity with the PyTorch module but unused: a per-channel
    # constant before InstanceNorm(affine=False) is removed exactly by the mean
    # subtraction and leaves the variance unchanged.
    del bias
    N, C_in, H, W = x_nchw.shape
    C_out = weight_oihw.shape[0]
    out_dtype = x_nchw.dtype
    out_itemsize = jnp.dtype(out_dtype).itemsize
    patch_itemsize = jnp.dtype(compute_dtype).itemsize

    patch_budget, out_budget, vmem_ceiling = _vmem_budgets()

    # im2col in compute_dtype (halves the dominant HBM stream for bf16).
    patches, Ho, Wo = _im2col_kp(x_nchw.astype(compute_dtype))      # (N, K, P)
    K = 3 * 3 * C_in
    P = Ho * Wo

    # P tiling: TP multiple of 128; pad P up to a multiple of TP with zero columns
    # (zero conv output -> no effect on the IN sums, sliced off in the wrapper).
    TP = _choose_p_tile(P, K, patch_itemsize, patch_budget)
    P_pad = _round_up(P, TP)
    n_pt = P_pad // TP
    if P_pad > P:
        patches = jnp.pad(patches, ((0, 0), (0, 0), (0, P_pad - P)))

    # C_out tiling (InstanceNorm is per-channel, so tiles are fully independent).
    TCO = _choose_co_tile(C_out, P_pad, out_itemsize, out_budget)
    n_co = C_out // TCO

    # (C_out, C_in, 3, 3) -> (C_out, kh, kw, C_in) -> (C_out, K); matches patch K order.
    w = jnp.transpose(weight_oihw, (0, 2, 3, 1)).reshape(C_out, K).astype(compute_dtype)

    # Patches stream: triple-buffer only when the per-tile matmul is short and the
    # pipeline actually has depth to hide.
    patch_tile_bytes = K * TP * patch_itemsize
    n_patch_buf = 3 if (n_pt >= 3 and patch_tile_bytes <= (1 << 20)) else 2
    patch_idx = lambda n, co, pt: (n, 0, pt)
    if n_patch_buf == 2:
        patch_spec = pl.BlockSpec((1, K, TP), patch_idx)
    else:
        try:
            patch_spec = pl.BlockSpec((1, K, TP), patch_idx,
                                      pipeline_mode=pl.Buffered(n_patch_buf))
        except TypeError:
            n_patch_buf = 2
            patch_spec = pl.BlockSpec((1, K, TP), patch_idx)

    out_block_bytes = TCO * P_pad * out_itemsize
    w_bytes = TCO * K * patch_itemsize
    vmem_need = (n_patch_buf * patch_tile_bytes + 2 * out_block_bytes + 2 * w_bytes
                 + 8 * TCO * 4 + (2 << 20))
    vmem_limit = int(min(max(vmem_need, 32 << 20), vmem_ceiling))

    cost = pl.CostEstimate(
        flops=2 * N * P * K * C_out,
        transcendentals=0,
        bytes_accessed=int(patches.size * patch_itemsize * n_co
                           + w.size * patch_itemsize
                           + 3 * N * C_out * P_pad * out_itemsize),
    )

    out_flat = pl.pallas_call(
        functools.partial(_trans_down_kernel, P),
        out_shape=jax.ShapeDtypeStruct((N, C_out, P_pad), out_dtype),
        grid=(N, n_co, n_pt),
        in_specs=[
            patch_spec,
            pl.BlockSpec((TCO, K), lambda n, co, pt: (co, 0)),
        ],
        out_specs=pl.BlockSpec((1, TCO, P_pad), lambda n, co, pt: (n, co, 0)),
        scratch_shapes=[
            pltpu.VMEM((TCO, 1), jnp.float32),   # sum
            pltpu.VMEM((TCO, 1), jnp.float32),   # sum of squares
        ],
        compiler_params=pltpu.CompilerParams(
            dimension_semantics=("parallel", "parallel", "arbitrary"),
            vmem_limit_bytes=vmem_limit),
        cost_estimate=cost,
    )(patches, w)

    return out_flat[:, :, :P].reshape(N, C_out, Ho, Wo)            # already NCHW


# -----------------------------------------------------------------------------
# Pure-JAX reference (includes the bias, to demonstrate the cancellation is exact)
# -----------------------------------------------------------------------------
def trans_down_ref(x_nchw, weight_oihw, bias):
    y = jax.lax.conv_general_dilated(
        x_nchw, weight_oihw,
        window_strides=(2, 2), padding=((1, 1), (1, 1)),
        dimension_numbers=("NCHW", "OIHW", "NCHW"))
    y = y + bias.reshape(1, -1, 1, 1)
    mu = jnp.mean(y, axis=(2, 3), keepdims=True)
    var = jnp.mean((y - mu) ** 2, axis=(2, 3), keepdims=True)
    y = (y - mu) * jax.lax.rsqrt(var + EPS)
    return jnp.maximum(y, 0.0)


if __name__ == "__main__":
    key = jax.random.PRNGKey(0)
    k_x, k_w, k_b = jax.random.split(key, 3)

    N, C_in, H, W = 2, 4, 16, 16
    C_out = 8

    x = jax.random.normal(k_x, (N, C_in, H, W), dtype=jnp.float32)
    weight = jax.random.normal(k_w, (C_out, C_in, 3, 3), dtype=jnp.float32) * 0.1
    bias = jax.random.normal(k_b, (C_out,), dtype=jnp.float32) * 0.1

    ref = jax.block_until_ready(trans_down_ref(x, weight, bias))

    # f32-operand path: tight numerical check.
    out_f32 = jax.block_until_ready(trans_down(x, weight, bias, compute_dtype=jnp.float32))
    assert out_f32.shape == (N, C_out, (H + 1) // 2, (W + 1) // 2), out_f32.shape
    assert jnp.allclose(out_f32, ref, atol=2e-3, rtol=2e-3), \
        float(jnp.max(jnp.abs(out_f32 - ref)))

    # Default bf16-operand path (halved patches HBM stream, native MXU rate); looser
    # tolerance for the bf16 operand rounding.
    out = jax.block_until_ready(trans_down(x, weight, bias))
    assert out.shape == ref.shape, out.shape
    assert jnp.allclose(out, ref, atol=3e-2, rtol=3e-2), \
        float(jnp.max(jnp.abs(out - ref)))

    print("KERNEL_OK")
</pallas_src>

<mosaic_0001>
module attributes {stable_mosaic.version = 11 : i64} {
  func.func @_trans_down_kernel(%arg0: i32, %arg1: i32, %arg2: i32, %arg3: memref<1x36x128xf32, #tpu.memory_space<vmem>>, %arg4: memref<8x36xf32, #tpu.memory_space<vmem>>, %arg5: memref<1x8x128xf32, #tpu.memory_space<vmem>>, %arg6: memref<8x1xf32, #tpu.memory_space<vmem>>, %arg7: memref<8x1xf32, #tpu.memory_space<vmem>>) attributes {dimension_semantics = [#tpu.dimension_semantics<parallel>, #tpu.dimension_semantics<parallel>, #tpu.dimension_semantics<arbitrary>], iteration_bounds = array<i64: 2, 1, 1>, scalar_prefetch = 0 : i64, scratch_operands = 2 : i64, tpu.core_type = #tpu.core_type<tc>, window_params = [{transform_indices = @transform_0, window_bounds = array<i64: 1, 36, 128>}, {transform_indices = @transform_1, window_bounds = array<i64: 8, 36>}, {transform_indices = @transform_2, window_bounds = array<i64: 1, 8, 128>}]} {
    %c0_i32 = arith.constant 0 : i32
    %0 = arith.cmpi eq, %arg2, %c0_i32 : i32
    %1 = arith.extui %0 : i1 to i32
    %c0_i32_0 = arith.constant 0 : i32
    %2 = arith.cmpi ne, %1, %c0_i32_0 : i32
    scf.if %2 {
      %cst_19 = arith.constant 0.000000e+00 : f32
      %27 = vector.broadcast %cst_19 : f32 to vector<8x1xf32>
      %c0_20 = arith.constant 0 : index
      %c0_21 = arith.constant 0 : index
      %28 = vector.load %arg6[%c0_20, %c0_21] : memref<8x1xf32, #tpu.memory_space<vmem>>, vector<8x1xf32>
      tpu.vector_store %arg6[%c0_20, %c0_21], %27 {strides = array<i32>} : memref<8x1xf32, #tpu.memory_space<vmem>>, vector<8x1xf32>,
      %cst_22 = arith.constant 0.000000e+00 : f32
      %29 = vector.broadcast %cst_22 : f32 to vector<8x1xf32>
      %c0_23 = arith.constant 0 : index
      %c0_24 = arith.constant 0 : index
      %30 = vector.load %arg7[%c0_23, %c0_24] : memref<8x1xf32, #tpu.memory_space<vmem>>, vector<8x1xf32>
      tpu.vector_store %arg7[%c0_23, %c0_24], %29 {strides = array<i32>} : memref<8x1xf32, #tpu.memory_space<vmem>>, vector<8x1xf32>,
    } else {
    }
    %c0 = arith.constant 0 : index
    %c0_1 = arith.constant 0 : index
    %3 = vector.load %arg4[%c0, %c0_1] : memref<8x36xf32, #tpu.memory_space<vmem>>, vector<8x36xf32>
    %c0_2 = arith.constant 0 : index
    %c0_3 = arith.constant 0 : index
    %c0_4 = arith.constant 0 : index
    %4 = vector.load %arg3[%c0_2, %c0_3, %c0_4] : memref<1x36x128xf32, #tpu.memory_space<vmem>>, vector<1x36x128xf32>
    %5 = vector.shape_cast %4 : vector<1x36x128xf32> to vector<36x128xf32>
    %cst = arith.constant dense<0.000000e+00> : vector<8x128xf32>
    %6 = tpu.matmul %3, %5, %cst {dimension_numbers = #tpu.dot_dimension_numbers<[1], [0], [0], [1], [0, 0, 1, 1], [], []>} : vector<8x36xf32>, vector<36x128xf32>, vector<8x128xf32> -> vector<8x128xf32>
    %c0_5 = arith.constant 0 : index
    %c0_6 = arith.constant 0 : index
    %7 = vector.load %arg6[%c0_5, %c0_6] : memref<8x1xf32, #tpu.memory_space<vmem>>, vector<8x1xf32>
    %cst_7 = arith.constant dense<0.000000e+00> : vector<8xf32>
    %8 = vector.multi_reduction <add>, %6, %cst_7 [1] : vector<8x128xf32> to vector<8xf32>
    %9 = vector.shape_cast %8 : vector<8xf32> to vector<8x1xf32>
    %10 = arith.addf %7, %9 : vector<8x1xf32>
    %c0_8 = arith.constant 0 : index
    %c0_9 = arith.constant 0 : index
    %11 = vector.load %arg6[%c0_8, %c0_9] : memref<8x1xf32, #tpu.memory_space<vmem>>, vector<8x1xf32>
    tpu.vector_store %arg6[%c0_8, %c0_9], %10 {strides = array<i32>} : memref<8x1xf32, #tpu.memory_space<vmem>>, vector<8x1xf32>,
    %c0_10 = arith.constant 0 : index
    %c0_11 = arith.constant 0 : index
    %12 = vector.load %arg7[%c0_10, %c0_11] : memref<8x1xf32, #tpu.memory_space<vmem>>, vector<8x1xf32>
    %13 = arith.mulf %6, %6 : vector<8x128xf32>
    %cst_12 = arith.constant dense<0.000000e+00> : vector<8xf32>
    %14 = vector.multi_reduction <add>, %13, %cst_12 [1] : vector<8x128xf32> to vector<8xf32>
    %15 = vector.shape_cast %14 : vector<8xf32> to vector<8x1xf32>
    %16 = arith.addf %12, %15 : vector<8x1xf32>
    %c0_13 = arith.constant 0 : index
    %c0_14 = arith.constant 0 : index
    %17 = vector.load %arg7[%c0_13, %c0_14] : memref<8x1xf32, #tpu.memory_space<vmem>>, vector<8x1xf32>
    tpu.vector_store %arg7[%c0_13, %c0_14], %16 {strides = array<i32>} : memref<8x1xf32, #tpu.memory_space<vmem>>, vector<8x1xf32>,
    %c128_i32 = arith.constant 128 : i32
    %18 = arith.muli %arg2, %c128_i32 : i32
    %19 = tpu.assume_multiple %18, 128 : i32
    %c0_15 = arith.constant 0 : index
    %c0_16 = arith.constant 0 : index
    %20 = arith.index_cast %19 : i32 to index
    %21 = vector.load %arg5[%c0_15, %c0_16, %20] : memref<1x8x128xf32, #tpu.memory_space<vmem>>, vector<1x8x128xf32>
    %22 = vector.shape_cast %21 : vector<1x8x128xf32> to vector<8x128xf32>
    %23 = vector.shape_cast %6 : vector<8x128xf32> to vector<1x8x128xf32>
    tpu.vector_store %arg5[%c0_15, %c0_16, %20], %23 {strides = array<i32>} : memref<1x8x128xf32, #tpu.memory_space<vmem>>, vector<1x8x128xf32>,
    %c0_i32_17 = arith.constant 0 : i32
    %24 = arith.cmpi eq, %arg2, %c0_i32_17 : i32
    %25 = arith.extui %24 : i1 to i32
    %c0_i32_18 = arith.constant 0 : i32
    %26 = arith.cmpi ne, %25, %c0_i32_18 : i32
    scf.if %26 {
      %c0_19 = arith.constant 0 : index
      %c0_20 = arith.constant 0 : index
      %27 = vector.load %arg6[%c0_19, %c0_20] : memref<8x1xf32, #tpu.memory_space<vmem>>, vector<8x1xf32>
      %cst_21 = arith.constant 1.562500e-02 : f32
      %28 = vector.broadcast %cst_21 : f32 to vector<8x1xf32>
      %29 = arith.mulf %27, %28 : vector<8x1xf32>
      %c0_22 = arith.constant 0 : index
      %c0_23 = arith.constant 0 : index
      %30 = vector.load %arg7[%c0_22, %c0_23] : memref<8x1xf32, #tpu.memory_space<vmem>>, vector<8x1xf32>
      %cst_24 = arith.constant 1.562500e-02 : f32
      %31 = vector.broadcast %cst_24 : f32 to vector<8x1xf32>
      %32 = arith.mulf %30, %31 : vector<8x1xf32>
      %33 = arith.mulf %29, %29 : vector<8x1xf32>
      %34 = arith.subf %32, %33 : vector<8x1xf32>
      %cst_25 = arith.constant 9.99999974E-6 : f32
      %35 = vector.broadcast %cst_25 : f32 to vector<8x1xf32>
      %36 = arith.addf %34, %35 : vector<8x1xf32>
      %37 = math.rsqrt %36 : vector<8x1xf32>
      %c0_26 = arith.constant 0 : index
      %c0_27 = arith.constant 0 : index
      %c0_28 = arith.constant 0 : index
      %38 = vector.load %arg5[%c0_26, %c0_27, %c0_28] : memref<1x8x128xf32, #tpu.memory_space<vmem>>, vector<1x8x128xf32>
      %39 = vector.shape_cast %38 : vector<1x8x128xf32> to vector<8x128xf32>
      %40 = vector.broadcast %29 : vector<8x1xf32> to vector<8x128xf32>
      %41 = arith.subf %39, %40 : vector<8x128xf32>
      %42 = vector.broadcast %37 : vector<8x1xf32> to vector<8x128xf32>
      %43 = arith.mulf %41, %42 : vector<8x128xf32>
      %cst_29 = arith.constant 0.000000e+00 : f32
      %44 = vector.broadcast %cst_29 : f32 to vector<8x128xf32>
      %45 = arith.maximumf %43, %44 : vector<8x128xf32>
      %c0_30 = arith.constant 0 : index
      %c0_31 = arith.constant 0 : index
      %c0_32 = arith.constant 0 : index
      %46 = vector.load %arg5[%c0_30, %c0_31, %c0_32] : memref<1x8x128xf32, #tpu.memory_space<vmem>>, vector<1x8x128xf32>
      %47 = vector.shape_cast %46 : vector<1x8x128xf32> to vector<8x128xf32>
      %48 = vector.shape_cast %45 : vector<8x128xf32> to vector<1x8x128xf32>
      tpu.vector_store %arg5[%c0_30, %c0_31, %c0_32], %48 {strides = array<i32>} : memref<1x8x128xf32, #tpu.memory_space<vmem>>, vector<1x8x128xf32>,
    } else {
    }
    return
  }
  func.func @transform_0(%arg0: i32, %arg1: i32, %arg2: i32) -> (i32, i32, i32) {
    %c0_i32 = arith.constant 0 : i32
    %c0_i32_0 = arith.constant 0 : i32
    return %arg0, %c0_i32, %arg2 : i32, i32, i32
  }
  func.func @transform_1(%arg0: i32, %arg1: i32, %arg2: i32) -> (i32, i32) {
    %c0_i32 = arith.constant 0 : i32
    %c0_i32_0 = arith.constant 0 : i32
    return %arg1, %c0_i32 : i32, i32
  }
  func.func @transform_2(%arg0: i32, %arg1: i32, %arg2: i32) -> (i32, i32, i32) {
    %c0_i32 = arith.constant 0 : i32
    %c0_i32_0 = arith.constant 0 : i32
    return %arg0, %arg1, %c0_i32 : i32, i32, i32
  }
}

</mosaic_0001>

<llo_original>
// kernel: tpu_custom_call.1
$region0: #{tpu_custom_call.1}
  #allocation0 [shape = 'u32[]', space=smem, size = 0x4, offset = 0x4, fixed_abs, tag = 'smem constant byte address 0x4 - core index']
  #allocation1 [shape = 'u32[144,128]{1,0:T(1,128)}', space=vmem, size = 0x12000, scoped, tag = 'internal scratch']
  #allocation2 [shape = 'f32[8,1]{1,0:T(8,128)}', space=vmem, size = 0x1000, scoped, tag = 'scratch operand']
  #allocation3 [shape = 'f32[8,1]{1,0:T(8,128)}', space=vmem, size = 0x1000, scoped, tag = 'scratch operand']
  %s0 = inlined_call_operand.vmem [shape: f32[2,36,128], index: 0, kind: input, shape index: {}]
  %s1 = inlined_call_operand.vmem [shape: f32[8,36], index: 1, kind: input, shape index: {}]
  %s2 = inlined_call_operand.hbm [shape: f32[2,8,128], index: 2, kind: output, shape index: {}]
  %s3 = sld [smem:[#allocation0]]
  $region49: #{tpu_custom_call.1} parent=0
    _
  %s5 = ssub.s32 1, %s3
  %s6 = scalar_select 0, %s5, %s3
  $region1: #{tpu_custom_call.1} parent=0
    #allocation4 [shape = 'u8[8192]{0}', space=vmem, size = 0x2000, scoped, tag = 'output window, operand 0']
    #allocation5 [shape = 's32[2]{0}', space=sflag, size = 0x8, scoped, tag = 'scoped memory for tpu_custom_call.1']
    %7 = vsyncpa [#allocation5], 0
    %s8 = scalar_lea.sflag [#allocation5], 1
    %9 = vsyncpa %s8, 0
    loop: start=0, step=1, limit=4
    $region2: #{tpu_custom_call.1} parent=1 // loop_pre_header
      _
    $region3: #{tpu_custom_call.1} parent=1 // loop_header
      %s11 = sphi 0, %s15
      %p12 = scmp.ge.s32.totalorder %s11, 4
      %s18 = sphi 0, %s37
      %s19 = sphi 0, %s33
      %s20 = sphi 0, %s29
      %s21 = sphi 0, %s18
      %s22 = sphi 0, %s19
      %s23 = sphi 0, %s20
      %s24 = sphi 0, %s21
      %s25 = sphi 0, %s22
      %s26 = sphi 0, %s23
      %s42 = sphi 0, %s44
      %s45 = sphi 0, %s42
      %s46 = sphi 0, %s45
      %s62 = sphi 0, %s46
      %s68 = sphi 0, %s70
      %s71 = sphi 0, %s68
      %s72 = sphi 0, %s71
      %s88 = sphi 0, %s72
      %s96 = sphi 0, %s98
      %s99 = sphi 0, %s96
      %s100 = sphi 0, %s99
      %s116 = sphi 0, %s100
    $region4: #{tpu_custom_call.1} parent=1 // loop_header_branch
      %14 = sbr.rel (%p12) target = $region8
    $region5: #{tpu_custom_call.1} parent=1 // loop_body
      %s16 = ssub.s32 %s11, 1
      %s17 = ssub.s32 %s11, 2
      %s27 = sadd.s32 1, %s20
      %p28 = scmp.ge.s32.totalorder %s27, 1
      %s29 = scalar_select %p28, 0, %s27
      %s30 = sadd.s32 1, %s19
      %s31 = scalar_select %p28, %s30, %s19
      %p32 = scmp.ge.s32.totalorder %s31, 1
      %s33 = scalar_select %p32, 0, %s31
      %s34 = sadd.s32 1, %s18
      %s35 = scalar_select %p32, %s34, %s18
      %p36 = scmp.ge.s32.totalorder %s35, 2
      %s37 = scalar_select %p36, 0, %s35
      %s38 = ssub.s32 %s18, %s37
      %s39 = ssub.s32 %s20, %s29
      %s40 = sor.u32 %s38, %s39
      %p41 = scmp.eq.s32.totalorder %s40, 0
      %s43 = sadd.s32 %s42, 1
      %s44 = scalar_select %p41, %s42, %s43
      %p47 = pneg %p41
      %p48 = scmp.eq.s32.totalorder %s11, 1
      %p49 = por %p47, %p48
      %p50 = scmp.ne.s32.totalorder %s42, %s45
      %p51 = scmp.eq.s32.totalorder %s11, 0
      %p52 = por %p50, %p51
      %p53 = scmp.ne.s32.totalorder %s42, %s45
      %p54 = scmp.eq.s32.totalorder %s16, 1
      %p55 = por %p53, %p54
      %p56 = scmp.ne.s32.totalorder %s45, %s46
      %p57 = scmp.eq.s32.totalorder %s16, 0
      %p58 = por %p56, %p57
      %p59 = scmp.ne.s32.totalorder %s45, %s46
      %p60 = scmp.eq.s32.totalorder %s17, 1
      %p61 = por %p59, %p60
      %p63 = scmp.ne.s32.totalorder %s46, %s62
      %p64 = scmp.eq.s32.totalorder %s17, 0
      %p65 = por %p63, %p64
      %s66 = ssub.s32 %s19, %s33
      %p67 = scmp.eq.s32.totalorder %s66, 0
      %s69 = sadd.s32 %s68, 1
      %s70 = scalar_select %p67, %s68, %s69
      %p73 = pneg %p67
      %p74 = scmp.eq.s32.totalorder %s11, 1
      %p75 = por %p73, %p74
      %p76 = scmp.ne.s32.totalorder %s68, %s71
      %p77 = scmp.eq.s32.totalorder %s11, 0
      %p78 = por %p76, %p77
      %p79 = scmp.ne.s32.totalorder %s68, %s71
      %p80 = scmp.eq.s32.totalorder %s16, 1
      %p81 = por %p79, %p80
      %p82 = scmp.ne.s32.totalorder %s71, %s72
      %p83 = scmp.eq.s32.totalorder %s16, 0
      %p84 = por %p82, %p83
      %p85 = scmp.ne.s32.totalorder %s71, %s72
      %p86 = scmp.eq.s32.totalorder %s17, 1
      %p87 = por %p85, %p86
      %p89 = scmp.ne.s32.totalorder %s72, %s88
      %p90 = scmp.eq.s32.totalorder %s17, 0
      %p91 = por %p89, %p90
      %s92 = ssub.s32 %s18, %s37
      %s93 = ssub.s32 %s19, %s33
      %s94 = sor.u32 %s92, %s93
      %p95 = scmp.eq.s32.totalorder %s94, 0
      %s97 = sadd.s32 %s96, 1
      %s98 = scalar_select %p95, %s96, %s97
      %p101 = pneg %p95
      %p102 = scmp.eq.s32.totalorder %s11, 1
      %p103 = por %p101, %p102
      %p104 = scmp.ne.s32.totalorder %s96, %s99
      %p105 = scmp.eq.s32.totalorder %s11, 0
      %p106 = por %p104, %p105
      %p107 = scmp.ne.s32.totalorder %s96, %s99
      %p108 = scmp.eq.s32.totalorder %s16, 1
      %p109 = por %p107, %p108
      %p110 = scmp.ne.s32.totalorder %s99, %s100
      %p111 = scmp.eq.s32.totalorder %s16, 0
      %p112 = por %p110, %p111
      %p113 = scmp.ne.s32.totalorder %s99, %s100
      %p114 = scmp.eq.s32.totalorder %s17, 1
      %p115 = por %p113, %p114
      %p117 = scmp.ne.s32.totalorder %s100, %s116
      %p118 = scmp.eq.s32.totalorder %s17, 0
      %p119 = por %p117, %p118
      %p120 = scmp.le.s32.totalorder 1, %s11
      %p121 = scmp.lt.s32.totalorder %s11, 3
      %p122 = pnand %p120, %p121
      %p123 = pneg %p122
      // Predicated region
      $region9: #{tpu_custom_call.1} parent=5 // pred_check
        _
      $region10: #{tpu_custom_call.1} parent=5 // pred_check_branch
        %125 = sbr.rel (%p122) target = $region12
      $region11: #{tpu_custom_call.1} parent=5 // pred_region
        %s126 = ssub.s32 %s11, 1
        // Predicated region
        $region13: #{tpu_custom_call.1} parent=11 // pred_check
          %p127 = pneg %p84
        $region14: #{tpu_custom_call.1} parent=11 // pred_check_branch
          %129 = sbr.rel (%p127) target = $region16
        $region15: #{tpu_custom_call.1} parent=11 // pred_region
          %p130 = scmp.lt.s32.totalorder %s22, 0
          %s131 = scalar_select %p130, %s22, 0
          %s132 = smul.addr %s131, 8
          %s133 = scalar_lea.vmem %s1, %s132
        $region16: #{tpu_custom_call.1} parent=11 // pred_fallthru
          _
      $region12: #{tpu_custom_call.1} parent=5 // pred_fallthru
        _
      %p134 = scmp.lt.s32.totalorder %s11, 2
      // Predicated region
      $region17: #{tpu_custom_call.1} parent=5 // pred_check
        %p135 = pneg %p134
      $region18: #{tpu_custom_call.1} parent=5 // pred_check_branch
        %137 = sbr.rel (%p135) target = $region20
      $region19: #{tpu_custom_call.1} parent=5 // pred_region
        // Predicated region
        $region21: #{tpu_custom_call.1} parent=19 // pred_check
          %p138 = pneg %p52
        $region22: #{tpu_custom_call.1} parent=19 // pred_check_branch
          %140 = sbr.rel (%p138) target = $region24
        $region23: #{tpu_custom_call.1} parent=19 // pred_region
          %p141 = scmp.lt.s32.totalorder %s18, 1
          %s142 = scalar_select %p141, %s18, 1
          %p143 = scmp.lt.s32.totalorder %s20, 0
          %s144 = scalar_select %p143, %s20, 0
          %s145 = smul.addr %s142, 5
          %s146 = sadd.s32 %s144, %s145
          %s147 = smul.addr %s146, 8
          %s148 = scalar_lea.vmem %s0, %s147
        $region24: #{tpu_custom_call.1} parent=19 // pred_fallthru
          _
      $region20: #{tpu_custom_call.1} parent=5 // pred_fallthru
        _
      %p149 = scmp.le.s32.totalorder 1, %s11
      %p150 = scmp.lt.s32.totalorder %s11, 3
      %p151 = pnand %p149, %p150
      %p152 = pneg %p151
      // Predicated region
      $region25: #{tpu_custom_call.1} parent=5 // pred_check
        _
      $region26: #{tpu_custom_call.1} parent=5 // pred_check_branch
        %154 = sbr.rel (%p151) target = $region28
      $region27: #{tpu_custom_call.1} parent=5 // pred_region
        %s155 = ssub.s32 %s11, 1
        %p156 = scmp.lt.s32.totalorder %s21, 1
        %s157 = scalar_select %p156, %s21, 1
        %p158 = scmp.lt.s32.totalorder %s23, 0
        %s159 = scalar_select %p158, %s23, 0
        %s160 = smul.addr %s157, 5
        %s161 = sadd.s32 %s159, %s160
        %s162 = smul.addr %s161, 8
        %s163 = scalar_lea.vmem %s0, %s162
        %p164 = pneg %p58
        %p165 = pneg %p55
        %p166 = scmp.lt.s32.totalorder %s22, 0
        %s167 = scalar_select %p166, %s22, 0
        %s168 = smul.addr %s167, 8
        %s169 = scalar_lea.vmem %s1, %s168
        %p170 = pneg %p84
        %p171 = pneg %p81
        %p172 = pneg %p112
        %p173 = pneg %p109
        %s174 = sand.u32 %s99, 1
        %s175 = scalar_lea.sflag [#allocation5], %s174
        %s176 = sand.u32 %s99, 1
        %s177 = smul.addr %s176, 8
        %s178 = scalar_lea.vmem [#allocation4], %s177
        %p179 = scmp.lt.s32.totalorder %s21, 1
        %s180 = scalar_select %p179, %s21, 1
        %p181 = scmp.lt.s32.totalorder %s23, 0
        %s182 = scalar_select %p181, %s23, 0
        %s183 = smul.addr %s180, 5
        %s184 = sadd.s32 %s182, %s183
        %s185 = smul.addr %s184, 8
        %s186 = scalar_lea.vmem %s0, %s185
        %p187 = scmp.lt.s32.totalorder %s22, 0
        %s188 = scalar_select %p187, %s22, 0
        %s189 = smul.addr %s188, 8
        %s190 = scalar_lea.vmem %s1, %s189
        %p191 = scmp.eq.s32.totalorder %s23, 0
        // Predicated region
        $region29: #{tpu_custom_call.1} parent=27 // pred_check
          %p192 = pneg %p191
        $region30: #{tpu_custom_call.1} parent=27 // pred_check_branch
          %194 = sbr.rel (%p192) target = $region32
        $region31: #{tpu_custom_call.1} parent=27 // pred_region
          %vm195 = vcmask 7168
          %196 = vst.msk [vmem:[#allocation2] sm:$0xff] %vm195, 0.0
          %197 = vst.msk [vmem:[#allocation3] sm:$0xff] %vm195, 0.0
        $region32: #{tpu_custom_call.1} parent=27 // pred_fallthru
          _
        %v198 = vld [vmem:[%s190] sm:$0xff]
        %v199 = vld [vmem:[%s186] sm:$0xff]
        %v200 = vld [vmem:[%s186 + $0x8] sm:$0xff]
        %v201 = vld [vmem:[%s186 + $0x10] sm:$0xff]
        %v202 = vld [vmem:[%s186 + $0x18] sm:$0xff]
        %v203 = vld [vmem:[%s186 + $0x20] sm:$0xf]
        %vm204 = vcmask 293888
        %v206 = vsel %vm204, %v198, 0
        %vm208 = vcmask 1043456
        %v210 = vsel %vm208, %v203, 0
        %212 = vmatprep.subr.mxu0 0.0
        %213 = vmatpush1.msra.mxu0 %v199
        %214 = vmatprep.subr.mxu0 0.0
        %215 = vmatpush1.msra.mxu0 %v200
        %216 = vmatprep.subr.mxu0 0.0
        %217 = vmatpush1.msra.mxu0 %v201
        %218 = vmatprep.subr.mxu0 0.0
        %219 = vmatpush1.msra.mxu0 %v202
        %220 = vmatprep.subr.mxu0 0.0
        %221 = vmatpush1.msra.mxu0 %v210
        %222 = vmatprep.subr.mxu0 0.0
        %223 = vmatpush1.msra.mxu0 0.0
        %224 = vmatprep.subr.mxu0 0.0
        %225 = vmatpush1.msra.mxu0 0.0
        %226 = vmatprep.subr.mxu0 0.0
        %227 = vmatpush1.msra.mxu0 0.0
        %228 = vmatprep.subr.mxu0 0.0
        %229 = vmatpush1.msra.mxu0 0.0
        %230 = vmatprep.subr.mxu0 0.0
        %231 = vmatpush1.msra.mxu0 0.0
        %232 = vmatprep.subr.mxu0 0.0
        %233 = vmatpush1.msra.mxu0 0.0
        %234 = vmatprep.subr.mxu0 0.0
        %235 = vmatpush1.msra.mxu0 0.0
        %236 = vmatprep.subr.mxu0 0.0
        %237 = vmatpush1.msra.mxu0 0.0
        %238 = vmatprep.subr.mxu0 0.0
        %239 = vmatpush1.msra.mxu0 0.0
        %240 = vmatprep.subr.mxu0 0.0
        %241 = vmatpush1.msra.mxu0 0.0
        %242 = vmatprep.subr.mxu0 0.0
        %243 = vmatpush1.msra.mxu0 0.0
        %244 = vmatprep.subr.mxu0 0.0
        %245 = vmatpush1.msra.mxu0 0.0
        %246 = vmatprep.subr.mxu0 0.0
        %247 = vmatpush1.msra.mxu0 0.0
        %248 = vmatprep.subr.mxu0 0.0
        %249 = vmatpush1.msra.mxu0 0.0
        %250 = vmatprep.subr.mxu0 0.0
        %251 = vmatpush1.msra.mxu0 0.0
        %252 = vmatprep.subr.mxu0 0.0
        %253 = vmatpush1.msra.mxu0 0.0
        %254 = vmatprep.subr.mxu0 0.0
        %255 = vmatpush1.msra.mxu0 0.0
        %256 = vmatprep.subr.mxu0 0.0
        %257 = vmatpush1.msra.mxu0 0.0
        %258 = vmatprep.subr.mxu0 0.0
        %259 = vmatpush1.msra.mxu0 0.0
        %260 = vmatprep.subr.mxu0 0.0
        %261 = vmatpush1.msra.mxu0 0.0
        %262 = vmatprep.subr.mxu0 0.0
        %263 = vmatpush1.msra.mxu0 0.0
        %264 = vmatprep.subr.mxu0 0.0
        %265 = vmatpush1.msra.mxu0 0.0
        %266 = vmatprep.subr.mxu0 0.0
        %267 = vmatpush1.msra.mxu0 0.0
        %268 = vmatprep.subr.mxu0 0.0
        %269 = vmatpush1.msra.mxu0 0.0
        %270 = vmatprep.subr.mxu0 0.0
        %271 = vmatpush1.msra.mxu0 0.0
        %272 = vmatprep.subr.mxu0 0.0
        %273 = vmatpush1.msra.mxu0 0.0
        %274 = vmatprep.subr.mxu0 0.0
        %275 = vmatpush1.msra.mxu0 0.0
        %276 = vmatprep.mubr.f32.mxu0 0.0
        %277 = vmatmul.mubr.f32.gmra.mrb[0].mxu0 %v206
        %v278 = vpop.f32.mrb[0].mxu0
        %v279 = vadd.f32 0.0, %v278
        %v280 = vpop.f32.mrb[0].mxu0
        %281 = vdwg.mxu0
        %v282 = vld [vmem:[#allocation2] sm:$0xff]
        %283 = vadd.xlane.f32.xlu0 %v279
        %v284 = vpop.xlane.xlu0 %283
        %v285 = vadd.f32 %v282, %v284
        %vm286 = vcmask 7168
        %287 = vst.msk [vmem:[#allocation2] sm:$0xff] %vm286, %v285
        %v288 = vld [vmem:[#allocation3] sm:$0xff]
        %v289 = vmul.f32 %v279, %v279
        %290 = vadd.xlane.f32.xlu0 %v289
        %v291 = vpop.xlane.xlu0 %290
        %v292 = vadd.f32 %v288, %v291
        %293 = vst.msk [vmem:[#allocation3] sm:$0xff] %vm286, %v292
        %s294 = smul.u32 %s23, 128
        %s295 = sshra.s32 %s294, 7
        %s296 = sand.u32 %s294, 127
        %s297 = scalar_lea.vmem %s178, %s295 [#allocation4]
        %298 = vst [vmem:[%s297] sm:$0xff] %v279
        // Predicated region
        $region33: #{tpu_custom_call.1} parent=27 // pred_check
          %p299 = pneg %p191
        $region34: #{tpu_custom_call.1} parent=27 // pred_check_branch
          %301 = sbr.rel (%p299) target = $region36
        $region35: #{tpu_custom_call.1} parent=27 // pred_region
          %v302 = vld [vmem:[#allocation2] sm:$0xff]
          %v303 = vmul.f32 %v302, 0.015625
          %v304 = vld [vmem:[#allocation3] sm:$0xff]
          %v305 = vmul.f32 %v304, 0.015625
          %v306 = vmul.f32 %v303, %v303
          %v307 = vsub.f32 %v305, %v306
          %v308 = vadd.f32 %v307, 1e-05
          %v309 = vrsqrt.pop %v308
          %v310 = vld [vmem:[%s178] sm:$0xff]
          %312 = vset.pattern.permute.xlu0 0
          %313 = vperm.xlu0 %312, %v303
          %v314 = vpop.permute.xlu0 %313
          %v316 = vsub.f32 %v310, %v314
          %318 = vset.pattern.permute.xlu0 0
          %319 = vperm.xlu0 %318, %v309
          %v320 = vpop.permute.xlu0 %319
          %v322 = vmul.f32 %v316, %v320
          %v323 = vmax.f32 %v322, 0.0
          %324 = vst [vmem:[%s178] sm:$0xff] %v323
        $region36: #{tpu_custom_call.1} parent=27 // pred_fallthru
          _
        %s325 = sand.u32 %s99, 1
        %s326 = scalar_lea.sflag [#allocation5], %s325
        %s327 = sand.u32 %s99, 1
        %s328 = smul.addr %s327, 8
        %s329 = scalar_lea.vmem [#allocation4], %s328
        // Predicated region
        $region37: #{tpu_custom_call.1} parent=27 // pred_check
          %p330 = pneg %p109
        $region38: #{tpu_custom_call.1} parent=27 // pred_check_branch
          %332 = sbr.rel (%p330) target = $region40
        $region39: #{tpu_custom_call.1} parent=27 // pred_region
          %s334 = ssub.s32 128, 128
          %335 = vsyncadd %s326, %s334
          %s336 = sadd.s32 %s22, %s21
          %s337 = smul.addr %s336, 128
          %s338 = scalar_lea.hbm %s2, %s337
          %s340 = sshll.u32 %s329, 4
          %s341 = int_to_ptr.vmem [resolvable:$true] %s340
          %343 = dma.vmem_to_hbm [thread:$0]  %s341, 128, %s338, %s326
        $region40: #{tpu_custom_call.1} parent=27 // pred_fallthru
          _
      $region28: #{tpu_custom_call.1} parent=5 // pred_fallthru
        _
      %p344 = scmp.le.s32.totalorder 2, %s11
      // Predicated region
      $region41: #{tpu_custom_call.1} parent=5 // pred_check
        %p345 = pneg %p344
      $region42: #{tpu_custom_call.1} parent=5 // pred_check_branch
        %347 = sbr.rel (%p345) target = $region44
      $region43: #{tpu_custom_call.1} parent=5 // pred_region
        %s348 = ssub.s32 %s11, 2
        // Predicated region
        $region45: #{tpu_custom_call.1} parent=43 // pred_check
          %p349 = pneg %p115
        $region46: #{tpu_custom_call.1} parent=43 // pred_check_branch
          %351 = sbr.rel (%p349) target = $region48
        $region47: #{tpu_custom_call.1} parent=43 // pred_region
          %s352 = sand.u32 %s100, 1
          %s353 = scalar_lea.sflag [#allocation5], %s352
          %s354 = sand.u32 %s100, 1
          %s355 = smul.addr %s354, 8
          %s356 = scalar_lea.vmem [#allocation4], %s355
          %357 = dma.done %s353, 128
        $region48: #{tpu_custom_call.1} parent=43 // pred_fallthru
          _
      $region44: #{tpu_custom_call.1} parent=5 // pred_fallthru
        _
    $region6: #{tpu_custom_call.1} parent=1 // loop_footer
      %s15 = sadd.s32 1, %s11
    $region7: #{tpu_custom_call.1} parent=1 // loop_footer_branch
      %10 = sbr.rel target = $region3
    $region8: #{tpu_custom_call.1} parent=1 // loop_exit
      _
    %358 = vsyncpa [#allocation5], 1
    %s359 = scalar_lea.sflag [#allocation5], 1
    %360 = vsyncpa %s359, 1

</llo_original>
